<compile_context>
chip_gen: v7x
topology: tpu7x:2x2x1
jax: 0.10.0
libtpu: 0.0.40
codegen_flags: <defaults>
</compile_context>

<pallas_src>
import jax
import jax.numpy as jnp
from jax import lax
from jax.experimental import pallas as pl
from jax.experimental.pallas import tpu as pltpu


def decoder_rnn_kernel(ids_ref, emb_ref, wx_ref, wh3_ref, b_ref,
                       h3_ref, prev_c_ref, out_ref):
    B = ids_ref.shape[0]
    V = emb_ref.shape[0]
    H = prev_c_ref.shape[1]

    # --- embedding lookup as one-hot matmul (MXU); row 0 is the zero padding row ---
    ids = ids_ref[...]                                           # (B, 1) int32
    vocab_iota = lax.broadcasted_iota(jnp.int32, (B, V), 1)      # (B, V)
    onehot = (vocab_iota == ids).astype(jnp.float32)             # (B, V)
    src_emb = jnp.dot(onehot, emb_ref[...],
                      preferred_element_type=jnp.float32)        # (B, E)

    # --- fused gates: src_emb @ Wx  +  [parent_h|sibling|prev_h] @ Wh3  +  (b_i+b_h) ---
    gates = (
        jnp.dot(src_emb, wx_ref[...], preferred_element_type=jnp.float32)
        + jnp.dot(h3_ref[...], wh3_ref[...], preferred_element_type=jnp.float32)
        + b_ref[...]
    )                                                            # (B, 4H)

    # --- activations on the full (B, 4H) vreg: 2 EUP passes instead of 4 ---
    s = jax.nn.sigmoid(gates)        # [sig(i) | sig(f) | sig(g) | sig(o)]
    t = jnp.tanh(gates)              # [  .    |   .    | tanh(g)|   .   ]

    ingate     = s[:, 0 * H:1 * H]
    forgetgate = s[:, 1 * H:2 * H]
    cellgate   = t[:, 2 * H:3 * H]
    outgate    = s[:, 3 * H:4 * H]

    cy = forgetgate * prev_c_ref[...] + ingate * cellgate
    hy = outgate * jnp.tanh(cy)

    # --- single lane-packed store: [cy | hy] -> (B, 2H) ---
    out_ref[...] = jnp.concatenate([cy, hy], axis=1)


def decoder_rnn_forward(input_src, emb_table,
                        wi_x, wi_p, wi_s, b_i, w_h, b_h,
                        prev_c, prev_h, parent_h, sibling_state):
    """Weights are passed pre-transposed as (in, out); i2h weight split as
    (wi_x, wi_p, wi_s) along its input dim, matching concat(src_emb, parent_h, sib)."""
    B, H = prev_c.shape
    ids = input_src.astype(jnp.int32).reshape(B, 1)

    # Host-side fusion: one (3H, 4H) weight for all H-wide inputs, one bias.
    w_h3 = jnp.concatenate([wi_p, wi_s, w_h], axis=0)                 # (3H, 4H)
    b_fused = b_i + b_h                                               # (1, 4H)
    h3 = jnp.concatenate([parent_h, sibling_state, prev_h], axis=1)   # (B, 3H)

    vmem = pl.BlockSpec(memory_space=pltpu.MemorySpace.VMEM)
    out = pl.pallas_call(
        decoder_rnn_kernel,
        out_shape=jax.ShapeDtypeStruct((B, 2 * H), jnp.float32),
        in_specs=[vmem] * 7,
        out_specs=vmem,
    )(ids, emb_table, wi_x, w_h3, b_fused, h3, prev_c)

    return out[:, :H], out[:, H:]


decoder_rnn_forward = jax.jit(decoder_rnn_forward)


def reference_forward(input_src, emb_table,
                      wi_x, wi_p, wi_s, b_i, w_h, b_h,
                      prev_c, prev_h, parent_h, sibling_state):
    """Plain-JAX reference mirroring the PyTorch module."""
    src_emb = emb_table[input_src]                       # (B, E), row 0 == zeros
    x = jnp.concatenate([src_emb, parent_h, sibling_state], axis=1)
    w_i = jnp.concatenate([wi_x, wi_p, wi_s], axis=0)    # (E+2H, 4H)
    gates = x @ w_i + b_i + prev_h @ w_h + b_h
    H = prev_c.shape[1]
    i, f, g, o = (gates[:, 0:H], gates[:, H:2 * H],
                  gates[:, 2 * H:3 * H], gates[:, 3 * H:4 * H])
    i, f, o = jax.nn.sigmoid(i), jax.nn.sigmoid(f), jax.nn.sigmoid(o)
    g = jnp.tanh(g)
    cy = f * prev_c + i * g
    hy = o * jnp.tanh(cy)
    return cy, hy


if __name__ == "__main__":
    # Small shapes consistent with the module (rnn_size=H, word_embedding_size=300).
    B, H, E, V = 8, 32, 300, 50

    key = jax.random.PRNGKey(0)
    ks = jax.random.split(key, 12)

    # Embedding table; padding_idx=0 -> zero row.
    emb_table = 0.1 * jax.random.normal(ks[0], (V, E), jnp.float32)
    emb_table = emb_table.at[0].set(0.0)

    # i2h: Linear(E + 2H -> 4H), transposed (in, out), split into 3 parts.
    wi_x = 0.1 * jax.random.normal(ks[1], (E, 4 * H), jnp.float32)
    wi_p = 0.1 * jax.random.normal(ks[2], (H, 4 * H), jnp.float32)
    wi_s = 0.1 * jax.random.normal(ks[3], (H, 4 * H), jnp.float32)
    b_i  = 0.1 * jax.random.normal(ks[4], (1, 4 * H), jnp.float32)

    # h2h: Linear(H -> 4H), transposed.
    w_h = 0.1 * jax.random.normal(ks[5], (H, 4 * H), jnp.float32)
    b_h = 0.1 * jax.random.normal(ks[6], (1, 4 * H), jnp.float32)

    # Inputs.
    input_src     = jax.random.randint(ks[7], (B,), 0, V, jnp.int32)
    prev_c        = jax.random.normal(ks[8],  (B, H), jnp.float32)
    prev_h        = jax.random.normal(ks[9],  (B, H), jnp.float32)
    parent_h      = jax.random.normal(ks[10], (B, H), jnp.float32)
    sibling_state = jax.random.normal(ks[11], (B, H), jnp.float32)

    cy, hy = decoder_rnn_forward(input_src, emb_table,
                                 wi_x, wi_p, wi_s, b_i, w_h, b_h,
                                 prev_c, prev_h, parent_h, sibling_state)
    jax.block_until_ready((cy, hy))

    cy_ref, hy_ref = reference_forward(input_src, emb_table,
                                       wi_x, wi_p, wi_s, b_i, w_h, b_h,
                                       prev_c, prev_h, parent_h, sibling_state)
    assert jnp.allclose(cy, cy_ref, atol=1e-5, rtol=1e-5)
    assert jnp.allclose(hy, hy_ref, atol=1e-5, rtol=1e-5)

    print("KERNEL_OK")
</pallas_src>

<mosaic_0001>
module attributes {stable_mosaic.version = 11 : i64} {
  func.func @decoder_rnn_kernel(%arg0: memref<8x1xi32, #tpu.memory_space<vmem>>, %arg1: memref<50x300xf32, #tpu.memory_space<vmem>>, %arg2: memref<300x128xf32, #tpu.memory_space<vmem>>, %arg3: memref<96x128xf32, #tpu.memory_space<vmem>>, %arg4: memref<1x128xf32, #tpu.memory_space<vmem>>, %arg5: memref<8x96xf32, #tpu.memory_space<vmem>>, %arg6: memref<8x32xf32, #tpu.memory_space<vmem>>, %arg7: memref<8x64xf32, #tpu.memory_space<vmem>>) attributes {dimension_semantics = [], scalar_prefetch = 0 : i64, scratch_operands = 0 : i64, tpu.core_type = #tpu.core_type<tc>} {
    %c0 = arith.constant 0 : index
    %c0_0 = arith.constant 0 : index
    %0 = vector.load %arg0[%c0, %c0_0] : memref<8x1xi32, #tpu.memory_space<vmem>>, vector<8x1xi32>
    %1 = tpu.iota {dimensions = array<i32: 1>} : vector<8x50xi32>
    %2 = vector.broadcast %0 : vector<8x1xi32> to vector<8x50xi32>
    %3 = arith.cmpi eq, %1, %2 : vector<8x50xi32>
    %4 = arith.extui %3 : vector<8x50xi1> to vector<8x50xi32>
    %5 = arith.sitofp %4 : vector<8x50xi32> to vector<8x50xf32>
    %c0_1 = arith.constant 0 : index
    %c0_2 = arith.constant 0 : index
    %6 = vector.load %arg1[%c0_1, %c0_2] : memref<50x300xf32, #tpu.memory_space<vmem>>, vector<50x300xf32>
    %cst = arith.constant dense<0.000000e+00> : vector<8x300xf32>
    %7 = tpu.matmul %5, %6, %cst {dimension_numbers = #tpu.dot_dimension_numbers<[1], [0], [0], [1], [0, 0, 1, 1], [], []>} : vector<8x50xf32>, vector<50x300xf32>, vector<8x300xf32> -> vector<8x300xf32>
    %c0_3 = arith.constant 0 : index
    %c0_4 = arith.constant 0 : index
    %8 = vector.load %arg2[%c0_3, %c0_4] : memref<300x128xf32, #tpu.memory_space<vmem>>, vector<300x128xf32>
    %cst_5 = arith.constant dense<0.000000e+00> : vector<8x128xf32>
    %9 = tpu.matmul %7, %8, %cst_5 {dimension_numbers = #tpu.dot_dimension_numbers<[1], [0], [0], [1], [0, 0, 1, 1], [], []>} : vector<8x300xf32>, vector<300x128xf32>, vector<8x128xf32> -> vector<8x128xf32>
    %c0_6 = arith.constant 0 : index
    %c0_7 = arith.constant 0 : index
    %10 = vector.load %arg5[%c0_6, %c0_7] : memref<8x96xf32, #tpu.memory_space<vmem>>, vector<8x96xf32>
    %c0_8 = arith.constant 0 : index
    %c0_9 = arith.constant 0 : index
    %11 = vector.load %arg3[%c0_8, %c0_9] : memref<96x128xf32, #tpu.memory_space<vmem>>, vector<96x128xf32>
    %cst_10 = arith.constant dense<0.000000e+00> : vector<8x128xf32>
    %12 = tpu.matmul %10, %11, %cst_10 {dimension_numbers = #tpu.dot_dimension_numbers<[1], [0], [0], [1], [0, 0, 1, 1], [], []>} : vector<8x96xf32>, vector<96x128xf32>, vector<8x128xf32> -> vector<8x128xf32>
    %13 = arith.addf %9, %12 : vector<8x128xf32>
    %c0_11 = arith.constant 0 : index
    %c0_12 = arith.constant 0 : index
    %14 = vector.load %arg4[%c0_11, %c0_12] : memref<1x128xf32, #tpu.memory_space<vmem>>, vector<1x128xf32>
    %15 = vector.broadcast %14 : vector<1x128xf32> to vector<8x128xf32>
    %16 = arith.addf %13, %15 : vector<8x128xf32>
    %17 = arith.negf %16 : vector<8x128xf32>
    %18 = math.exp %17 : vector<8x128xf32>
    %cst_13 = arith.constant 1.000000e+00 : f32
    %19 = vector.broadcast %cst_13 : f32 to vector<8x128xf32>
    %20 = arith.addf %19, %18 : vector<8x128xf32>
    %21 = arith.divf %19, %20 : vector<8x128xf32>
    %22 = math.tanh %16 : vector<8x128xf32>
    %23 = vector.extract_strided_slice %21 {offsets = [0, 0], sizes = [8, 32], strides = [1, 1]} : vector<8x128xf32> to vector<8x32xf32>
    %24 = vector.extract_strided_slice %21 {offsets = [0, 32], sizes = [8, 32], strides = [1, 1]} : vector<8x128xf32> to vector<8x32xf32>
    %25 = vector.extract_strided_slice %22 {offsets = [0, 64], sizes = [8, 32], strides = [1, 1]} : vector<8x128xf32> to vector<8x32xf32>
    %26 = vector.extract_strided_slice %21 {offsets = [0, 96], sizes = [8, 32], strides = [1, 1]} : vector<8x128xf32> to vector<8x32xf32>
    %c0_14 = arith.constant 0 : index
    %c0_15 = arith.constant 0 : index
    %27 = vector.load %arg6[%c0_14, %c0_15] : memref<8x32xf32, #tpu.memory_space<vmem>>, vector<8x32xf32>
    %28 = arith.mulf %24, %27 : vector<8x32xf32>
    %29 = arith.mulf %23, %25 : vector<8x32xf32>
    %30 = arith.addf %28, %29 : vector<8x32xf32>
    %31 = math.tanh %30 : vector<8x32xf32>
    %32 = arith.mulf %26, %31 : vector<8x32xf32>
    %33 = tpu.concatenate %30, %32 in 1 : vector<8x32xf32>, vector<8x32xf32> -> vector<8x64xf32>
    %c0_16 = arith.constant 0 : index
    %c0_17 = arith.constant 0 : index
    %34 = vector.load %arg7[%c0_16, %c0_17] : memref<8x64xf32, #tpu.memory_space<vmem>>, vector<8x64xf32>
    tpu.vector_store %arg7[%c0_16, %c0_17], %33 {strides = array<i32>} : memref<8x64xf32, #tpu.memory_space<vmem>>, vector<8x64xf32>,
    return
  }
}

</mosaic_0001>

<llo_original>
// kernel: decoder_rnn_forward.1
$region0: #{decoder_rnn_forward.1}
  #allocation0 [shape = 'u32[]', space=smem, size = 0x4, offset = 0x4, fixed_abs, tag = 'smem constant byte address 0x4 - core index']
  #allocation1 [shape = 'u32[144,128]{1,0:T(1,128)}', space=vmem, size = 0x12000, scoped, tag = 'internal scratch']
  %s0 = inlined_call_operand.vmem [shape: s32[8,1], index: 0, kind: input, shape index: {}]
  %s1 = inlined_call_operand.vmem [shape: f32[50,300], index: 1, kind: input, shape index: {}]
  %s2 = inlined_call_operand.hbm [shape: f32[300,128], index: 2, kind: input, shape index: {}]
  %s3 = inlined_call_operand.vmem [shape: f32[96,128], index: 3, kind: input, shape index: {}]
  %s4 = inlined_call_operand.vmem [shape: f32[1,128], index: 4, kind: input, shape index: {}]
  %s5 = inlined_call_operand.vmem [shape: f32[8,96], index: 5, kind: input, shape index: {}]
  %s6 = inlined_call_operand.vmem [shape: f32[8,32], index: 6, kind: input, shape index: {}]
  %s7 = inlined_call_operand.vmem [shape: f32[8,64], index: 7, kind: output, shape index: {}]
  %s8 = sld [smem:[#allocation0]]
  $region42: #{decoder_rnn_forward.1} parent=0
    _
  %s10 = ssub.s32 1, %s8
  %s11 = scalar_select 0, %s10, %s8
  $region1: #{decoder_rnn_forward.1} parent=0
    #allocation2 [shape = 'u8[155648]{0}', space=vmem, size = 0x26000, scoped, tag = 'input window, operand 2, single buffered']
    #allocation3 [shape = 's32[1]{0}', space=sflag, size = 0x4, scoped, tag = 'scoped memory for decoder_rnn_forward.1']
    %12 = vsyncpa [#allocation3], 0
    // Predicated region
    $region2: #{decoder_rnn_forward.1} parent=1 // pred_check
      _
    $region3: #{decoder_rnn_forward.1} parent=1 // pred_check_branch
      %14 = sbr.rel (0) target = $region5
    $region4: #{decoder_rnn_forward.1} parent=1 // pred_region
      _
    $region5: #{decoder_rnn_forward.1} parent=1 // pred_fallthru
      _
    // Predicated region
    $region6: #{decoder_rnn_forward.1} parent=1 // pred_check
      _
    $region7: #{decoder_rnn_forward.1} parent=1 // pred_check_branch
      %16 = sbr.rel (0) target = $region9
    $region8: #{decoder_rnn_forward.1} parent=1 // pred_region
      _
    $region9: #{decoder_rnn_forward.1} parent=1 // pred_fallthru
      _
    // Predicated region
    $region10: #{decoder_rnn_forward.1} parent=1 // pred_check
      _
    $region11: #{decoder_rnn_forward.1} parent=1 // pred_check_branch
      %18 = sbr.rel (0) target = $region13
    $region12: #{decoder_rnn_forward.1} parent=1 // pred_region
      %s20 = ssub.s32 4864, 4864
      %21 = vsyncadd [#allocation3], %s20
      %s22 = sshll.u32 [#allocation2], 4
      %s23 = int_to_ptr.vmem [resolvable:$true] %s22
      %28 = dma.hbm_to_vmem [thread:$0]  %s2, 4864, %s23, [#allocation3], 128, 128, 8
    $region13: #{decoder_rnn_forward.1} parent=1 // pred_fallthru
      _
    // Predicated region
    $region14: #{decoder_rnn_forward.1} parent=1 // pred_check
      _
    $region15: #{decoder_rnn_forward.1} parent=1 // pred_check_branch
      %30 = sbr.rel (0) target = $region17
    $region16: #{decoder_rnn_forward.1} parent=1 // pred_region
      _
    $region17: #{decoder_rnn_forward.1} parent=1 // pred_fallthru
      _
    // Predicated region
    $region18: #{decoder_rnn_forward.1} parent=1 // pred_check
      _
    $region19: #{decoder_rnn_forward.1} parent=1 // pred_check_branch
      %32 = sbr.rel (0) target = $region21
    $region20: #{decoder_rnn_forward.1} parent=1 // pred_region
      _
    $region21: #{decoder_rnn_forward.1} parent=1 // pred_fallthru
      _
    // Predicated region
    $region22: #{decoder_rnn_forward.1} parent=1 // pred_check
      _
    $region23: #{decoder_rnn_forward.1} parent=1 // pred_check_branch
      %34 = sbr.rel (0) target = $region25
    $region24: #{decoder_rnn_forward.1} parent=1 // pred_region
      _
    $region25: #{decoder_rnn_forward.1} parent=1 // pred_fallthru
      _
    // Predicated region
    $region26: #{decoder_rnn_forward.1} parent=1 // pred_check
      _
    $region27: #{decoder_rnn_forward.1} parent=1 // pred_check_branch
      %36 = sbr.rel (0) target = $region29
    $region28: #{decoder_rnn_forward.1} parent=1 // pred_region
      _
    $region29: #{decoder_rnn_forward.1} parent=1 // pred_fallthru
      _
    // Predicated region
    $region30: #{decoder_rnn_forward.1} parent=1 // pred_check
      _
    $region31: #{decoder_rnn_forward.1} parent=1 // pred_check_branch
      %38 = sbr.rel (0) target = $region33
    $region32: #{decoder_rnn_forward.1} parent=1 // pred_region
      %39 = dma.done [#allocation3], 4864
    $region33: #{decoder_rnn_forward.1} parent=1 // pred_fallthru
      _
    %v40 = vld [vmem:[%s0] sm:$0xff]
    %v41 = vlaneseq
    %v42 = vand.u32 %v41, 127
    %43 = vset.pattern.permute.xlu0 0
    %44 = vperm.xlu0 %43, %v40
    %v45 = vpop.permute.xlu0 %44
    %vm46 = vcmp.eq.s32.totalorder %v42, %v45
    %v47 = vsel %vm46, 1, 0
    %v48 = vcvt.s32.f32 %v47
    %v49 = vld [vmem:[%s1] sm:$0xff]
    %v50 = vld [vmem:[%s1 + $0x8] sm:$0xff]
    %v51 = vld [vmem:[%s1 + $0x10] sm:$0xff]
    %v52 = vld [vmem:[%s1 + $0x18] sm:$0xff]
    %v53 = vld [vmem:[%s1 + $0x20] sm:$0xff]
    %v54 = vld [vmem:[%s1 + $0x28] sm:$0xff]
    %v55 = vld [vmem:[%s1 + $0x30] sm:$0xff]
    %v56 = vld [vmem:[%s1 + $0x38] sm:$0xff]
    %v57 = vld [vmem:[%s1 + $0x40] sm:$0xff]
    %v58 = vld [vmem:[%s1 + $0x48] sm:$0xff]
    %v59 = vld [vmem:[%s1 + $0x50] sm:$0xff]
    %v60 = vld [vmem:[%s1 + $0x58] sm:$0xff]
    %v61 = vld [vmem:[%s1 + $0x60] sm:$0xff]
    %v62 = vld [vmem:[%s1 + $0x68] sm:$0xff]
    %v63 = vld [vmem:[%s1 + $0x70] sm:$0xff]
    %v64 = vld [vmem:[%s1 + $0x78] sm:$0xff]
    %v65 = vld [vmem:[%s1 + $0x80] sm:$0xff]
    %v66 = vld [vmem:[%s1 + $0x88] sm:$0xff]
    %v67 = vld [vmem:[%s1 + $0x90] sm:$0x3]
    %v68 = vld [vmem:[%s1 + $0x98] sm:$0x3]
    %v69 = vld [vmem:[%s1 + $0xa0] sm:$0x3]
    %vm70 = vcmask 408576
    %v72 = vsel %vm70, %v48, 0
    %vm74 = vcmask 1041408
    %v76 = vsel %vm74, %v67, 0
    %v79 = vsel %vm74, %v68, 0
    %v82 = vsel %vm74, %v69, 0
    %84 = vmatprep.subr.mxu0 %v50
    %85 = vmatpush1.msra.mxu0 %v49
    %86 = vmatprep.subr.mxu0 %v53
    %87 = vmatpush1.msra.mxu0 %v52
    %88 = vmatprep.subr.mxu0 %v56
    %89 = vmatpush1.msra.mxu0 %v55
    %90 = vmatprep.subr.mxu0 %v59
    %91 = vmatpush1.msra.mxu0 %v58
    %92 = vmatprep.subr.mxu0 %v62
    %93 = vmatpush1.msra.mxu0 %v61
    %94 = vmatprep.subr.mxu0 %v65
    %95 = vmatpush1.msra.mxu0 %v64
    %96 = vmatprep.subr.mxu0 %v79
    %97 = vmatpush1.msra.mxu0 %v76
    %98 = vmatprep.subr.mxu0 0.0
    %99 = vmatpush1.msra.mxu0 0.0
    %100 = vmatprep.subr.mxu0 0.0
    %101 = vmatpush1.msra.mxu0 0.0
    %102 = vmatprep.subr.mxu0 0.0
    %103 = vmatpush1.msra.mxu0 0.0
    %104 = vmatprep.subr.mxu0 0.0
    %105 = vmatpush1.msra.mxu0 0.0
    %106 = vmatprep.subr.mxu0 0.0
    %107 = vmatpush1.msra.mxu0 0.0
    %108 = vmatprep.subr.mxu0 0.0
    %109 = vmatpush1.msra.mxu0 0.0
    %110 = vmatprep.subr.mxu0 0.0
    %111 = vmatpush1.msra.mxu0 0.0
    %112 = vmatprep.subr.mxu0 0.0
    %113 = vmatpush1.msra.mxu0 0.0
    %114 = vmatprep.subr.mxu0 0.0
    %115 = vmatpush1.msra.mxu0 0.0
    %116 = vmatprep.subr.mxu0 0.0
    %117 = vmatpush1.msra.mxu0 0.0
    %118 = vmatprep.subr.mxu0 0.0
    %119 = vmatpush1.msra.mxu0 0.0
    %120 = vmatprep.subr.mxu0 0.0
    %121 = vmatpush1.msra.mxu0 0.0
    %122 = vmatprep.subr.mxu0 0.0
    %123 = vmatpush1.msra.mxu0 0.0
    %124 = vmatprep.subr.mxu0 0.0
    %125 = vmatpush1.msra.mxu0 0.0
    %126 = vmatprep.subr.mxu0 0.0
    %127 = vmatpush1.msra.mxu0 0.0
    %128 = vmatprep.subr.mxu0 0.0
    %129 = vmatpush1.msra.mxu0 0.0
    %130 = vmatprep.subr.mxu0 0.0
    %131 = vmatpush1.msra.mxu0 0.0
    %132 = vmatprep.subr.mxu0 0.0
    %133 = vmatpush1.msra.mxu0 0.0
    %134 = vmatprep.subr.mxu0 0.0
    %135 = vmatpush1.msra.mxu0 0.0
    %136 = vmatprep.subr.mxu0 0.0
    %137 = vmatpush1.msra.mxu0 0.0
    %138 = vmatprep.subr.mxu0 0.0
    %139 = vmatpush1.msra.mxu0 0.0
    %140 = vmatprep.subr.mxu0 0.0
    %141 = vmatpush1.msra.mxu0 0.0
    %142 = vmatprep.subr.mxu0 0.0
    %143 = vmatpush1.msra.mxu0 0.0
    %144 = vmatprep.subr.mxu0 0.0
    %145 = vmatpush1.msra.mxu0 0.0
    %146 = vmatprep.subr.mxu0 0.0
    %147 = vmatpush1.msra.mxu0 0.0
    %148 = vmatprep.mubr.f32.mxu0 0.0
    %149 = vmatmul.mubr.f32.gmra.mrb[0].mxu0 %v72
    %v150 = vpop.f32.mrb[0].mxu0
    %v151 = vadd.f32 0.0, %v150
    %v152 = vpop.f32.mrb[0].mxu0
    %v153 = vadd.f32 0.0, %v152
    %154 = vdwg.mxu0
    %155 = vmatprep.subr.mxu0 0.0
    %156 = vmatpush1.msra.mxu0 %v51
    %157 = vmatprep.subr.mxu0 0.0
    %158 = vmatpush1.msra.mxu0 %v54
    %159 = vmatprep.subr.mxu0 0.0
    %160 = vmatpush1.msra.mxu0 %v57
    %161 = vmatprep.subr.mxu0 0.0
    %162 = vmatpush1.msra.mxu0 %v60
    %163 = vmatprep.subr.mxu0 0.0
    %164 = vmatpush1.msra.mxu0 %v63
    %165 = vmatprep.subr.mxu0 0.0
    %166 = vmatpush1.msra.mxu0 %v66
    %167 = vmatprep.subr.mxu0 0.0
    %168 = vmatpush1.msra.mxu0 %v82
    %169 = vmatprep.subr.mxu0 0.0
    %170 = vmatpush1.msra.mxu0 0.0
    %171 = vmatprep.subr.mxu0 0.0
    %172 = vmatpush1.msra.mxu0 0.0
    %173 = vmatprep.subr.mxu0 0.0
    %174 = vmatpush1.msra.mxu0 0.0
    %175 = vmatprep.subr.mxu0 0.0
    %176 = vmatpush1.msra.mxu0 0.0
    %177 = vmatprep.subr.mxu0 0.0
    %178 = vmatpush1.msra.mxu0 0.0
    %179 = vmatprep.subr.mxu0 0.0
    %180 = vmatpush1.msra.mxu0 0.0
    %181 = vmatprep.subr.mxu0 0.0
    %182 = vmatpush1.msra.mxu0 0.0
    %183 = vmatprep.subr.mxu0 0.0
    %184 = vmatpush1.msra.mxu0 0.0
    %185 = vmatprep.subr.mxu0 0.0
    %186 = vmatpush1.msra.mxu0 0.0
    %187 = vmatprep.subr.mxu0 0.0
    %188 = vmatpush1.msra.mxu0 0.0
    %189 = vmatprep.subr.mxu0 0.0
    %190 = vmatpush1.msra.mxu0 0.0
    %191 = vmatprep.subr.mxu0 0.0
    %192 = vmatpush1.msra.mxu0 0.0
    %193 = vmatprep.subr.mxu0 0.0
    %194 = vmatpush1.msra.mxu0 0.0
    %195 = vmatprep.subr.mxu0 0.0
    %196 = vmatpush1.msra.mxu0 0.0
    %197 = vmatprep.subr.mxu0 0.0
    %198 = vmatpush1.msra.mxu0 0.0
    %199 = vmatprep.subr.mxu0 0.0
    %200 = vmatpush1.msra.mxu0 0.0
    %201 = vmatprep.subr.mxu0 0.0
    %202 = vmatpush1.msra.mxu0 0.0
    %203 = vmatprep.subr.mxu0 0.0
    %204 = vmatpush1.msra.mxu0 0.0
    %205 = vmatprep.subr.mxu0 0.0
    %206 = vmatpush1.msra.mxu0 0.0
    %207 = vmatprep.subr.mxu0 0.0
    %208 = vmatpush1.msra.mxu0 0.0
    %209 = vmatprep.subr.mxu0 0.0
    %210 = vmatpush1.msra.mxu0 0.0
    %211 = vmatprep.subr.mxu0 0.0
    %212 = vmatpush1.msra.mxu0 0.0
    %213 = vmatprep.subr.mxu0 0.0
    %214 = vmatpush1.msra.mxu0 0.0
    %215 = vmatprep.subr.mxu0 0.0
    %216 = vmatpush1.msra.mxu0 0.0
    %217 = vmatprep.subr.mxu0 0.0
    %218 = vmatpush1.msra.mxu0 0.0
    %219 = vmatprep.mubr.f32.mxu0 0.0
    %220 = vmatmul.mubr.f32.gmra.mrb[0].mxu0 %v72
    %v221 = vpop.f32.mrb[0].mxu0
    %v222 = vadd.f32 0.0, %v221
    %v223 = vpop.f32.mrb[0].mxu0
    %224 = vdwg.mxu0
    %v225 = vld [vmem:[#allocation2] sm:$0xff]
    %v226 = vld [vmem:[#allocation2 + $0x8] sm:$0xff]
    %v227 = vld [vmem:[#allocation2 + $0x10] sm:$0xff]
    %v228 = vld [vmem:[#allocation2 + $0x18] sm:$0xff]
    %v229 = vld [vmem:[#allocation2 + $0x20] sm:$0xff]
    %v230 = vld [vmem:[#allocation2 + $0x28] sm:$0xff]
    %v231 = vld [vmem:[#allocation2 + $0x30] sm:$0xff]
    %v232 = vld [vmem:[#allocation2 + $0x38] sm:$0xff]
    %v233 = vld [vmem:[#allocation2 + $0x40] sm:$0xff]
    %v234 = vld [vmem:[#allocation2 + $0x48] sm:$0xff]
    %v235 = vld [vmem:[#allocation2 + $0x50] sm:$0xff]
    %v236 = vld [vmem:[#allocation2 + $0x58] sm:$0xff]
    %v237 = vld [vmem:[#allocation2 + $0x60] sm:$0xff]
    %v238 = vld [vmem:[#allocation2 + $0x68] sm:$0xff]
    %v239 = vld [vmem:[#allocation2 + $0x70] sm:$0xff]
    %v240 = vld [vmem:[#allocation2 + $0x78] sm:$0xff]
    %v241 = vld [vmem:[#allocation2 + $0x80] sm:$0xff]
    %v242 = vld [vmem:[#allocation2 + $0x88] sm:$0xff]
    %v243 = vld [vmem:[#allocation2 + $0x90] sm:$0xff]
    %v244 = vld [vmem:[#allocation2 + $0x98] sm:$0xff]
    %v245 = vld [vmem:[#allocation2 + $0xa0] sm:$0xff]
    %v246 = vld [vmem:[#allocation2 + $0xa8] sm:$0xff]
    %v247 = vld [vmem:[#allocation2 + $0xb0] sm:$0xff]
    %v248 = vld [vmem:[#allocation2 + $0xb8] sm:$0xff]
    %v249 = vld [vmem:[#allocation2 + $0xc0] sm:$0xff]
    %v250 = vld [vmem:[#allocation2 + $0xc8] sm:$0xff]
    %v251 = vld [vmem:[#allocation2 + $0xd0] sm:$0xff]
    %v252 = vld [vmem:[#allocation2 + $0xd8] sm:$0xff]
    %v253 = vld [vmem:[#allocation2 + $0xe0] sm:$0xff]
    %v254 = vld [vmem:[#allocation2 + $0xe8] sm:$0xff]
    %v255 = vld [vmem:[#allocation2 + $0xf0] sm:$0xff]
    %v256 = vld [vmem:[#allocation2 + $0xf8] sm:$0xff]
    %v257 = vld [vmem:[#allocation2 + $0x100] sm:$0xff]
    %v258 = vld [vmem:[#allocation2 + $0x108] sm:$0xff]
    %v259 = vld [vmem:[#allocation2 + $0x110] sm:$0xff]
    %v260 = vld [vmem:[#allocation2 + $0x118] sm:$0xff]
    %v261 = vld [vmem:[#allocation2 + $0x120] sm:$0xff]
    %v262 = vld [vmem:[#allocation2 + $0x128] sm:$0xf]
    %v263 = vld [vmem:[%s5] sm:$0xff]
    %v264 = vld [vmem:[%s3] sm:$0xff]
    %v265 = vld [vmem:[%s3 + $0x8] sm:$0xff]
    %v266 = vld [vmem:[%s3 + $0x10] sm:$0xff]
    %v267 = vld [vmem:[%s3 + $0x18] sm:$0xff]
    %v268 = vld [vmem:[%s3 + $0x20] sm:$0xff]
    %v269 = vld [vmem:[%s3 + $0x28] sm:$0xff]
    %v270 = vld [vmem:[%s3 + $0x30] sm:$0xff]
    %v271 = vld [vmem:[%s3 + $0x38] sm:$0xff]
    %v272 = vld [vmem:[%s3 + $0x40] sm:$0xff]
    %v273 = vld [vmem:[%s3 + $0x48] sm:$0xff]
    %v274 = vld [vmem:[%s3 + $0x50] sm:$0xff]
    %v275 = vld [vmem:[%s3 + $0x58] sm:$0xff]
    %vm276 = vcmask 785408
    %v278 = vsel %vm276, %v263, 0
    %280 = vmatprep.subr.mxu0 0.0
    %281 = vmatpush1.msra.mxu0 %v264
    %282 = vmatprep.subr.mxu0 0.0
    %283 = vmatpush1.msra.mxu0 %v265
    %284 = vmatprep.subr.mxu0 0.0
    %285 = vmatpush1.msra.mxu0 %v266
    %286 = vmatprep.subr.mxu0 0.0
    %287 = vmatpush1.msra.mxu0 %v267
    %288 = vmatprep.subr.mxu0 0.0
    %289 = vmatpush1.msra.mxu0 %v268
    %290 = vmatprep.subr.mxu0 0.0
    %291 = vmatpush1.msra.mxu0 %v269
    %292 = vmatprep.subr.mxu0 0.0
    %293 = vmatpush1.msra.mxu0 %v270
    %294 = vmatprep.subr.mxu0 0.0
    %295 = vmatpush1.msra.mxu0 %v271
    %296 = vmatprep.subr.mxu0 0.0
    %297 = vmatpush1.msra.mxu0 %v272
    %298 = vmatprep.subr.mxu0 0.0
    %299 = vmatpush1.msra.mxu0 %v273
    %300 = vmatprep.subr.mxu0 0.0
    %301 = vmatpush1.msra.mxu0 %v274
    %302 = vmatprep.subr.mxu0 0.0
    %303 = vmatpush1.msra.mxu0 %v275
    %304 = vmatprep.subr.mxu0 0.0
    %305 = vmatpush1.msra.mxu0 0.0
    %306 = vmatprep.subr.mxu0 0.0
    %307 = vmatpush1.msra.mxu0 0.0
    %308 = vmatprep.subr.mxu0 0.0
    %309 = vmatpush1.msra.mxu0 0.0
    %310 = vmatprep.subr.mxu0 0.0
    %311 = vmatpush1.msra.mxu0 0.0
    %312 = vmatprep.subr.mxu0 0.0
    %313 = vmatpush1.msra.mxu0 0.0
    %314 = vmatprep.subr.mxu0 0.0
    %315 = vmatpush1.msra.mxu0 0.0
    %316 = vmatprep.subr.mxu0 0.0
    %317 = vmatpush1.msra.mxu0 0.0
    %318 = vmatprep.subr.mxu0 0.0
    %319 = vmatpush1.msra.mxu0 0.0
    %320 = vmatprep.subr.mxu0 0.0
    %321 = vmatpush1.msra.mxu0 0.0
    %322 = vmatprep.subr.mxu0 0.0
    %323 = vmatpush1.msra.mxu0 0.0
    %324 = vmatprep.subr.mxu0 0.0
    %325 = vmatpush1.msra.mxu0 0.0
    %326 = vmatprep.subr.mxu0 0.0
    %327 = vmatpush1.msra.mxu0 0.0
    %328 = vmatprep.subr.mxu0 0.0
    %329 = vmatpush1.msra.mxu0 0.0
    %330 = vmatprep.subr.mxu0 0.0
    %331 = vmatpush1.msra.mxu0 0.0
    %332 = vmatprep.subr.mxu0 0.0
    %333 = vmatpush1.msra.mxu0 0.0
    %334 = vmatprep.subr.mxu0 0.0
    %335 = vmatpush1.msra.mxu0 0.0
    %336 = vmatprep.subr.mxu0 0.0
    %337 = vmatpush1.msra.mxu0 0.0
    %338 = vmatprep.subr.mxu0 0.0
    %339 = vmatpush1.msra.mxu0 0.0
    %340 = vmatprep.subr.mxu0 0.0
    %341 = vmatpush1.msra.mxu0 0.0
    %342 = vmatprep.subr.mxu0 0.0
    %343 = vmatpush1.msra.mxu0 0.0
    %344 = vmatprep.mubr.f32.mxu0 0.0
    %345 = vmatmul.mubr.f32.gmra.mrb[0].mxu0 %v278
    %v346 = vpop.f32.mrb[0].mxu0
    %v347 = vadd.f32 0.0, %v346
    %v348 = vpop.f32.mrb[0].mxu0
    %349 = vdwg.mxu0
    %vm350 = vcmask 359424
    %v352 = vsel %vm350, %v222, 0
    %vm354 = vcmask 1043456
    %v356 = vsel %vm354, %v262, 0
    %358 = vmatprep.subr.mxu0 0.0
    %359 = vmatpush1.msra.mxu0 %v225
    %360 = vmatprep.subr.mxu0 0.0
    %361 = vmatpush1.msra.mxu0 %v226
    %362 = vmatprep.subr.mxu0 0.0
    %363 = vmatpush1.msra.mxu0 %v227
    %364 = vmatprep.subr.mxu0 0.0
    %365 = vmatpush1.msra.mxu0 %v228
    %366 = vmatprep.subr.mxu0 0.0
    %367 = vmatpush1.msra.mxu0 %v229
    %368 = vmatprep.subr.mxu0 0.0
    %369 = vmatpush1.msra.mxu0 %v230
    %370 = vmatprep.subr.mxu0 0.0
    %371 = vmatpush1.msra.mxu0 %v231
    %372 = vmatprep.subr.mxu0 0.0
    %373 = vmatpush1.msra.mxu0 %v232
    %374 = vmatprep.subr.mxu0 0.0
    %375 = vmatpush1.msra.mxu0 %v233
    %376 = vmatprep.subr.mxu0 0.0
    %377 = vmatpush1.msra.mxu0 %v234
    %378 = vmatprep.subr.mxu0 0.0
    %379 = vmatpush1.msra.mxu0 %v235
    %380 = vmatprep.subr.mxu0 0.0
    %381 = vmatpush1.msra.mxu0 %v236
    %382 = vmatprep.subr.mxu0 0.0
    %383 = vmatpush1.msra.mxu0 %v237
    %384 = vmatprep.subr.mxu0 0.0
    %385 = vmatpush1.msra.mxu0 %v238
    %386 = vmatprep.subr.mxu0 0.0
    %387 = vmatpush1.msra.mxu0 %v239
    %388 = vmatprep.subr.mxu0 0.0
    %389 = vmatpush1.msra.mxu0 %v240
    %390 = vmatprep.subr.mxu0 0.0
    %391 = vmatpush1.msra.mxu0 %v241
    %392 = vmatprep.subr.mxu0 0.0
    %393 = vmatpush1.msra.mxu0 %v242
    %394 = vmatprep.subr.mxu0 0.0
    %395 = vmatpush1.msra.mxu0 %v243
    %396 = vmatprep.subr.mxu0 0.0
    %397 = vmatpush1.msra.mxu0 %v244
    %398 = vmatprep.subr.mxu0 0.0
    %399 = vmatpush1.msra.mxu0 %v245
    %400 = vmatprep.subr.mxu0 0.0
    %401 = vmatpush1.msra.mxu0 %v246
    %402 = vmatprep.subr.mxu0 0.0
    %403 = vmatpush1.msra.mxu0 %v247
    %404 = vmatprep.subr.mxu0 0.0
    %405 = vmatpush1.msra.mxu0 %v248
    %406 = vmatprep.subr.mxu0 0.0
    %407 = vmatpush1.msra.mxu0 %v249
    %408 = vmatprep.subr.mxu0 0.0
    %409 = vmatpush1.msra.mxu0 %v250
    %410 = vmatprep.subr.mxu0 0.0
    %411 = vmatpush1.msra.mxu0 %v251
    %412 = vmatprep.subr.mxu0 0.0
    %413 = vmatpush1.msra.mxu0 %v252
    %414 = vmatprep.subr.mxu0 0.0
    %415 = vmatpush1.msra.mxu0 %v253
    %416 = vmatprep.subr.mxu0 0.0
    %417 = vmatpush1.msra.mxu0 %v254
    %418 = vmatprep.subr.mxu0 0.0
    %419 = vmatpush1.msra.mxu0 %v255
    %420 = vmatprep.subr.mxu0 0.0
    %421 = vmatpush1.msra.mxu0 %v256
    %422 = vmatprep.mubr.f32.mxu0 %v153
    %423 = vmatmul.mubr.f32.gmra.mrb[0].mxu0 %v151
    %v424 = vpop.f32.mrb[0].mxu0
    %v425 = vadd.f32 %v347, %v424
    %v426 = vpop.f32.mrb[0].mxu0
    %427 = vdwg.mxu0
    %428 = vmatprep.subr.mxu0 0.0
    %429 = vmatpush1.msra.mxu0 %v257
    %430 = vmatprep.subr.mxu0 0.0
    %431 = vmatpush1.msra.mxu0 %v258
    %432 = vmatprep.subr.mxu0 0.0
    %433 = vmatpush1.msra.mxu0 %v259
    %434 = vmatprep.subr.mxu0 0.0
    %435 = vmatpush1.msra.mxu0 %v260
    %436 = vmatprep.subr.mxu0 0.0
    %437 = vmatpush1.msra.mxu0 %v261
    %438 = vmatprep.subr.mxu0 0.0
    %439 = vmatpush1.msra.mxu0 %v356
    %440 = vmatprep.subr.mxu0 0.0
    %441 = vmatpush1.msra.mxu0 0.0
    %442 = vmatprep.subr.mxu0 0.0
    %443 = vmatpush1.msra.mxu0 0.0
    %444 = vmatprep.subr.mxu0 0.0
    %445 = vmatpush1.msra.mxu0 0.0
    %446 = vmatprep.subr.mxu0 0.0
    %447 = vmatpush1.msra.mxu0 0.0
    %448 = vmatprep.subr.mxu0 0.0
    %449 = vmatpush1.msra.mxu0 0.0
    %450 = vmatprep.subr.mxu0 0.0
    %451 = vmatpush1.msra.mxu0 0.0
    %452 = vmatprep.subr.mxu0 0.0
    %453 = vmatpush1.msra.mxu0 0.0
    %454 = vmatprep.subr.mxu0 0.0
    %455 = vmatpush1.msra.mxu0 0.0
    %456 = vmatprep.subr.mxu0 0.0
    %457 = vmatpush1.msra.mxu0 0.0
    %458 = vmatprep.subr.mxu0 0.0
    %459 = vmatpush1.msra.mxu0 0.0
    %460 = vmatprep.subr.mxu0 0.0
    %461 = vmatpush1.msra.mxu0 0.0
    %462 = vmatprep.subr.mxu0 0.0
    %463 = vmatpush1.msra.mxu0 0.0
    %464 = vmatprep.subr.mxu0 0.0
    %465 = vmatpush1.msra.mxu0 0.0
    %466 = vmatprep.subr.mxu0 0.0
    %467 = vmatpush1.msra.mxu0 0.0
    %468 = vmatprep.subr.mxu0 0.0
    %469 = vmatpush1.msra.mxu0 0.0
    %470 = vmatprep.subr.mxu0 0.0
    %471 = vmatpush1.msra.mxu0 0.0
    %472 = vmatprep.subr.mxu0 0.0
    %473 = vmatpush1.msra.mxu0 0.0
    %474 = vmatprep.subr.mxu0 0.0
    %475 = vmatpush1.msra.mxu0 0.0
    %476 = vmatprep.subr.mxu0 0.0
    %477 = vmatpush1.msra.mxu0 0.0
    %478 = vmatprep.subr.mxu0 0.0
    %479 = vmatpush1.msra.mxu0 0.0
    %480 = vmatprep.subr.mxu0 0.0
    %481 = vmatpush1.msra.mxu0 0.0
    %482 = vmatprep.subr.mxu0 0.0
    %483 = vmatpush1.msra.mxu0 0.0
    %484 = vmatprep.subr.mxu0 0.0
    %485 = vmatpush1.msra.mxu0 0.0
    %486 = vmatprep.subr.mxu0 0.0
    %487 = vmatpush1.msra.mxu0 0.0
    %488 = vmatprep.subr.mxu0 0.0
    %489 = vmatpush1.msra.mxu0 0.0
    %490 = vmatprep.subr.mxu0 0.0
    %491 = vmatpush1.msra.mxu0 0.0
    %492 = vmatprep.mubr.f32.mxu0 0.0
    %493 = vmatmul.mubr.f32.gmra.mrb[0].mxu0 %v352
    %v494 = vpop.f32.mrb[0].mxu0
    %v495 = vadd.f32 %v425, %v494
    %v496 = vpop.f32.mrb[0].mxu0
    %497 = vdwg.mxu0
    %v498 = vld [vmem:[%s4] sm:$0x1]
    %v500 = vlaneseq
    %v501 = vshrl.u32 %v500, 7
    %v502 = vsub.s32 0, %v501
    %v503 = vrot.slane %v498, %v502
    %v505 = vadd.f32 %v495, %v503
    %v506 = vxor.u32 %v505, 2147483648
    %v507 = vmul.f32 %v506, 1.442695
    %v508 = vpow.pop %v507
    %v509 = vadd.f32 %v508, 1.0
    %v510 = vrcp.pop %v509
    %v511 = vmul.f32 1.0, %v510
    %v512 = vtanh.pop %v505
    %v513 = vld [vmem:[%s6] sm:$0xff]
    %515 = vrot.lane.b32.xlu0 %v513, 32
    %v516 = vpop.permute.xlu0 %515
    %v518 = vmul.f32 %v511, %v516
    %520 = vrot.lane.b32.xlu0 %v512, 64
    %v521 = vpop.permute.xlu0 %520
    %v523 = vmul.f32 %v511, %v521
    %525 = vrot.lane.b32.xlu0 %v523, 32
    %v526 = vpop.permute.xlu0 %525
    %v528 = vadd.f32 %v518, %v526
    %v529 = vtanh.pop %v528
    %531 = vrot.lane.b32.xlu0 %v529, 64
    %v532 = vpop.permute.xlu0 %531
    %v534 = vmul.f32 %v511, %v532
    %536 = vrot.lane.b32.xlu0 %v528, 96
    %v537 = vpop.permute.xlu0 %536
    %540 = vrot.lane.b32.xlu0 %v534, 64
    %v541 = vpop.permute.xlu0 %540
    %vm543 = vcmask 261120
    %v544 = vsel %vm543, %v537, %v541
    %vm545 = vcmask 523264
    %546 = vst.msk [vmem:[%s7] sm:$0xff] %vm545, %v544
    // Predicated region
    $region34: #{decoder_rnn_forward.1} parent=1 // pred_check
      _
    $region35: #{decoder_rnn_forward.1} parent=1 // pred_check_branch
      %548 = sbr.rel (0) target = $region37
    $region36: #{decoder_rnn_forward.1} parent=1 // pred_region
      _
    $region37: #{decoder_rnn_forward.1} parent=1 // pred_fallthru
      _
    // Predicated region
    $region38: #{decoder_rnn_forward.1} parent=1 // pred_check
      _
    $region39: #{decoder_rnn_forward.1} parent=1 // pred_check_branch
      %550 = sbr.rel (0) target = $region41
    $region40: #{decoder_rnn_forward.1} parent=1 // pred_region
      _
    $region41: #{decoder_rnn_forward.1} parent=1 // pred_fallthru
      _
    %551 = vsyncpa [#allocation3], 1

</llo_original>
